<compile_context>
chip_gen: v5e
topology: v5e:2x2
jax: 0.10.0
libtpu: 0.0.40
codegen_flags: <defaults>
</compile_context>

<pallas_src>
import functools
import math

import jax
import jax.numpy as jnp
from jax.experimental import pallas as pl
from jax.experimental.pallas import tpu as pltpu

_TWO_PI = 2.0 * math.pi


def _gfp_kernel(x_ref, w_ref, out_ref):
    # x_ref: (TB, 1) f32, w_ref: (1, H) f32, out_ref: (TB, 2*H) f32
    h = w_ref.shape[1]
    t = x_ref[...] * _TWO_PI          # cheap (TB, 1) column multiply
    x_proj = t * w_ref[...]           # single full-width (TB, H) vmul
    s = jnp.sin(x_proj)
    c = jnp.cos(x_proj)
    if h % 128 == 0:
        # Lane-aligned half-slab stores (unmasked vst).
        out_ref[:, :h] = s
        out_ref[:, h:] = c
    else:
        # Keep the store lane-dense for odd embedding sizes.
        out_ref[...] = jnp.concatenate([s, c], axis=-1)


def _round_up(n, m):
    return ((n + m - 1) // m) * m


@functools.partial(jax.jit, static_argnames=("tb_cap",))
def gaussian_fourier_projection(x, W, *, tb_cap=512):
    """x: (B,) float, W: (E/2,) float -> (B, E) float32 [sin | cos]."""
    B = x.shape[0]
    H = W.shape[0]

    # Batch tile: multiple of 8 (sublane), capped so the double-buffered
    # (TB, 2H) f32 output tile stays small even on v7x's 64 MiB VMEM.
    TB = min(tb_cap, _round_up(B, 8))
    B_pad = _round_up(B, TB)

    x2 = x.astype(jnp.float32).reshape(B, 1)
    if B_pad != B:
        x2 = jnp.pad(x2, ((0, B_pad - B), (0, 0)))
    w2 = W.astype(jnp.float32).reshape(1, H)

    out = pl.pallas_call(
        _gfp_kernel,
        out_shape=jax.ShapeDtypeStruct((B_pad, 2 * H), jnp.float32),
        grid_spec=pl.GridSpec(
            grid=(B_pad // TB,),
            in_specs=[
                pl.BlockSpec((TB, 1), lambda i: (i, 0)),   # x tile
                pl.BlockSpec((1, H), lambda i: (0, 0)),    # W stays resident
            ],
            out_specs=pl.BlockSpec((TB, 2 * H), lambda i: (i, 0)),
        ),
        compiler_params=pltpu.CompilerParams(
            dimension_semantics=("parallel",),
        ),
    )(x2, w2)

    if B_pad != B:
        out = out[:B]
    return out


if __name__ == "__main__":
    embedding_size = 256
    scale = 1.0
    batch = 8

    key = jax.random.PRNGKey(0)
    k_w, k_x = jax.random.split(key)

    # Deterministic "parameter" init (same shape/semantics as torch.randn * scale).
    W = jax.random.normal(k_w, (embedding_size // 2,), dtype=jnp.float32) * scale
    # Noise-level inputs.
    x = jax.random.uniform(k_x, (batch,), dtype=jnp.float32)

    emb = gaussian_fourier_projection(x, W)
    emb = jax.block_until_ready(emb)

    # Pure-JAX reference check.
    x_proj = x[:, None] * W[None, :] * 2.0 * math.pi
    ref = jnp.concatenate([jnp.sin(x_proj), jnp.cos(x_proj)], axis=-1)
    assert emb.shape == (batch, embedding_size), emb.shape
    assert jnp.allclose(emb, ref, atol=1e-5, rtol=1e-5)

    print("KERNEL_OK")
</pallas_src>

<mosaic_0001>
module attributes {stable_mosaic.version = 11 : i64} {
  func.func @_gfp_kernel(%arg0: i32, %arg1: memref<8x1xf32, #tpu.memory_space<vmem>>, %arg2: memref<1x128xf32, #tpu.memory_space<vmem>>, %arg3: memref<8x256xf32, #tpu.memory_space<vmem>>) attributes {dimension_semantics = [#tpu.dimension_semantics<parallel>], iteration_bounds = array<i64: 1>, scalar_prefetch = 0 : i64, scratch_operands = 0 : i64, tpu.core_type = #tpu.core_type<tc>, window_params = [{transform_indices = @transform_0, window_bounds = array<i64: 8, 1>}, {pipeline_mode = #tpu.pipeline_mode<synchronous>, transform_indices = @transform_1, window_bounds = array<i64: 1, 128>}, {transform_indices = @transform_2, window_bounds = array<i64: 8, 256>}]} {
    %c0 = arith.constant 0 : index
    %c0_0 = arith.constant 0 : index
    %0 = vector.load %arg1[%c0, %c0_0] : memref<8x1xf32, #tpu.memory_space<vmem>>, vector<8x1xf32>
    %cst = arith.constant 6.28318548 : f32
    %1 = vector.broadcast %cst : f32 to vector<8x1xf32>
    %2 = arith.mulf %0, %1 : vector<8x1xf32>
    %c0_1 = arith.constant 0 : index
    %c0_2 = arith.constant 0 : index
    %3 = vector.load %arg2[%c0_1, %c0_2] : memref<1x128xf32, #tpu.memory_space<vmem>>, vector<1x128xf32>
    %4 = vector.broadcast %2 : vector<8x1xf32> to vector<8x128xf32>
    %5 = vector.broadcast %3 : vector<1x128xf32> to vector<8x128xf32>
    %6 = arith.mulf %4, %5 : vector<8x128xf32>
    %7 = math.sin %6 : vector<8x128xf32>
    %8 = math.cos %6 : vector<8x128xf32>
    %c0_3 = arith.constant 0 : index
    %c0_4 = arith.constant 0 : index
    %9 = vector.load %arg3[%c0_3, %c0_4] : memref<8x256xf32, #tpu.memory_space<vmem>>, vector<8x128xf32>
    tpu.vector_store %arg3[%c0_3, %c0_4], %7 {strides = array<i32>} : memref<8x256xf32, #tpu.memory_space<vmem>>, vector<8x128xf32>,
    %c0_5 = arith.constant 0 : index
    %c128 = arith.constant 128 : index
    %10 = vector.load %arg3[%c0_5, %c128] : memref<8x256xf32, #tpu.memory_space<vmem>>, vector<8x128xf32>
    tpu.vector_store %arg3[%c0_5, %c128], %8 {strides = array<i32>} : memref<8x256xf32, #tpu.memory_space<vmem>>, vector<8x128xf32>,
    return
  }
  func.func @transform_0(%arg0: i32) -> (i32, i32) {
    %c0_i32 = arith.constant 0 : i32
    %c0_i32_0 = arith.constant 0 : i32
    return %arg0, %c0_i32 : i32, i32
  }
  func.func @transform_1(%arg0: i32) -> (i32, i32) {
    %c0_i32 = arith.constant 0 : i32
    %c0_i32_0 = arith.constant 0 : i32
    %c0_i32_1 = arith.constant 0 : i32
    return %c0_i32, %c0_i32_0 : i32, i32
  }
  func.func @transform_2(%arg0: i32) -> (i32, i32) {
    %c0_i32 = arith.constant 0 : i32
    %c0_i32_0 = arith.constant 0 : i32
    return %arg0, %c0_i32 : i32, i32
  }
}

</mosaic_0001>

<llo_original>
// kernel: gaussian_fourier_projection.1
$region0: #{gaussian_fourier_projection.1}
  #allocation0 [shape = 'u32[]', space=smem, size = 0x4, offset = 0x4, fixed_abs, tag = 'smem constant byte address 0x4 - core index']
  #allocation1 [shape = 'u32[72,128]{1,0:T(1,128)}', space=vmem, size = 0x9000, scoped, tag = 'internal scratch']
  %s0 = inlined_call_operand.vmem [shape: f32[8,1], index: 0, kind: input, shape index: {}]
  %s1 = inlined_call_operand.vmem [shape: f32[1,128], index: 1, kind: input, shape index: {}]
  %s2 = inlined_call_operand.hbm [shape: f32[8,256], index: 2, kind: output, shape index: {}]
  %s3 = sld [smem:[#allocation0]]
  $region18: #{gaussian_fourier_projection.1} parent=0
    _
  %s5 = ssub.s32 1, %s3
  %s6 = scalar_select 0, %s5, %s3
  $region1: #{gaussian_fourier_projection.1} parent=0
    #allocation2 [shape = 'u8[8192]{0}', space=vmem, size = 0x2000, scoped, tag = 'output window, operand 0, single buffered']
    #allocation3 [shape = 's32[1]{0}', space=sflag, size = 0x4, scoped, tag = 'scoped memory for gaussian_fourier_projection.1']
    %7 = vsyncpa [#allocation3], 0
    // Predicated region
    $region2: #{gaussian_fourier_projection.1} parent=1 // pred_check
      _
    $region3: #{gaussian_fourier_projection.1} parent=1 // pred_check_branch
      %9 = sbr.rel (0) target = $region5
    $region4: #{gaussian_fourier_projection.1} parent=1 // pred_region
      _
    $region5: #{gaussian_fourier_projection.1} parent=1 // pred_fallthru
      _
    // Predicated region
    $region6: #{gaussian_fourier_projection.1} parent=1 // pred_check
      _
    $region7: #{gaussian_fourier_projection.1} parent=1 // pred_check_branch
      %11 = sbr.rel (0) target = $region9
    $region8: #{gaussian_fourier_projection.1} parent=1 // pred_region
      _
    $region9: #{gaussian_fourier_projection.1} parent=1 // pred_fallthru
      _
    %v12 = vld [vmem:[%s0] sm:$0xff]
    %v13 = vmul.f32 %v12, 6.2831855
    %v14 = vld [vmem:[%s1] sm:$0x1]
    %16 = vset.pattern.permute.xlu0 0
    %17 = vperm.xlu0 %16, %v13
    %v18 = vpop.permute.xlu0 %17
    %v21 = vperm.slane %v14, 0
    %v23 = vmul.f32 %v18, %v21
    %v24 = vand.u32 2147483647, %v23
    %vm25 = vcmp.le.f32.partialorder %v24, 0.7853982
    %vm26 = vcmp.lt.s32.totalorder %v23, 0
    %v27 = vand.u32 %v23, 2139095040
    %v28 = vshrl.u32 %v27, 23
    %v29 = vsub.s32 %v28, 127
    %v30 = vand.u32 2147483647, %v23
    %v31 = vand.u32 %v30, 8388607
    %v32 = vor.u32 %v31, 8388608
    %v33 = vsub.s32 0, %v32
    %v34 = vadd.s32 %v29, 1
    %vm35 = vcmp.gt.s32.totalorder %v34, 0
    %v36 = vsel %vm35, %v34, 0
    %v37 = vshrl.u32 %v36, 5
    %v38 = vand.u32 %v36, 31
    %v39 = vsub.s32 32, %v38
    %v40 = vshrl.u32 683565275, %v39
    %v41 = vshll.u32 683565275, %v38
    %v42 = vshrl.u32 2475754826, %v39
    %v43 = vor.u32 %v41, %v42
    %v44 = vshll.u32 2475754826, %v38
    %v45 = vshrl.u32 2131351028, %v39
    %v46 = vor.u32 %v44, %v45
    %v47 = vshll.u32 2131351028, %v38
    %v48 = vshrl.u32 2102212464, %v39
    %v49 = vor.u32 %v47, %v48
    %v50 = vshll.u32 2102212464, %v38
    %v51 = vshrl.u32 920167782, %v39
    %v52 = vor.u32 %v50, %v51
    %v53 = vshll.u32 920167782, %v38
    %v54 = vshrl.u32 1326507024, %v39
    %v55 = vor.u32 %v53, %v54
    %vm56 = vcmp.lt.s32.totalorder %v37, 1
    %vm57 = vcmp.lt.s32.totalorder %v37, 2
    %vm58 = vcmp.lt.s32.totalorder %v37, 3
    %vm59 = vcmp.lt.s32.totalorder %v37, 4
    %v60 = vsel %vm56, %v40, %v43
    %v61 = vsel %vm59, %v49, 2102212464
    %v62 = vsel %vm58, %v46, %v61
    %v63 = vsel %vm57, %v60, %v62
    %v64 = vsel %vm56, %v43, %v46
    %v65 = vsel %vm59, %v52, 920167782
    %v66 = vsel %vm58, %v49, %v65
    %v67 = vsel %vm57, %v64, %v66
    %v68 = vsel %vm56, %v46, %v49
    %v69 = vsel %vm59, %v55, 1326507024
    %v70 = vsel %vm58, %v52, %v69
    %v71 = vsel %vm57, %v68, %v70
    %v72 = vshll.u32 %v32, 8
    %v73 = vand.u32 %v72, 65535
    %v74 = vshrl.u32 %v72, 16
    %v75 = vand.u32 %v71, 65535
    %v76 = vshrl.u32 %v71, 16
    %v77 = vmul.u32 %v73, %v75
    %v78 = vmul.u32 %v73, %v76
    %v79 = vmul.u32 %v74, %v75
    %v80 = vmul.u32 %v74, %v76
    %v81 = vshll.u32 %v78, 16
    %v82 = vshrl.u32 %v78, 16
    %v83 = vshll.u32 %v79, 16
    %v84 = vshrl.u32 %v79, 16
    %vm85 = vc.u32 %v77, %v81
    %v86 = vsel %vm85, 1, 0
    %v87 = vadd.s32 %v77, %v81
    %v88 = vadd.s32 %v80, %v86
    %vm89 = vc.u32 %v87, %v83
    %v90 = vsel %vm89, 1, 0
    %v91 = vadd.s32 %v87, %v83
    %v92 = vadd.s32 %v88, %v90
    %v93 = vadd.s32 %v92, %v82
    %v94 = vadd.s32 %v93, %v84
    %v95 = vand.u32 %v72, 65535
    %v96 = vshrl.u32 %v72, 16
    %v97 = vand.u32 %v67, 65535
    %v98 = vshrl.u32 %v67, 16
    %v99 = vmul.u32 %v95, %v97
    %v100 = vmul.u32 %v95, %v98
    %v101 = vmul.u32 %v96, %v97
    %v102 = vmul.u32 %v96, %v98
    %v103 = vshll.u32 %v100, 16
    %v104 = vshrl.u32 %v100, 16
    %v105 = vshll.u32 %v101, 16
    %v106 = vshrl.u32 %v101, 16
    %vm107 = vc.u32 %v99, %v103
    %v108 = vsel %vm107, 1, 0
    %v109 = vadd.s32 %v99, %v103
    %v110 = vadd.s32 %v102, %v108
    %vm111 = vc.u32 %v109, %v105
    %v112 = vsel %vm111, 1, 0
    %v113 = vadd.s32 %v109, %v105
    %v114 = vadd.s32 %v110, %v112
    %v115 = vadd.s32 %v114, %v104
    %v116 = vadd.s32 %v115, %v106
    %v117 = vmul.u32 %v72, %v63
    %v118 = vadd.s32 %v94, %v113
    %vm119 = vc.u32 %v94, %v113
    %v120 = vadd.s32 %v116, 1
    %v121 = vsel %vm119, %v120, %v116
    %v122 = vadd.s32 %v117, %v121
    %v123 = vadd.s32 %v122, 536870912
    %v124 = vshrl.u32 %v123, 30
    %v125 = vshll.u32 %v124, 30
    %v126 = vsub.s32 %v122, %v125
    %vm127 = vcmp.lt.s32.totalorder %v126, 0
    %v128 = vsub.s32 0, %v126
    %v129 = vsel %vm127, %v128, %v126
    %v130 = vclz %v129
    %v131 = vsub.s32 %v130, 2
    %vm132 = vcmp.gt.s32.totalorder 0, %v131
    %v133 = vsel %vm132, 0, %v131
    %v134 = vsub.s32 32, %v133
    %v135 = vshll.u32 %v126, %v133
    %v136 = vshrl.u32 %v118, %v134
    %v137 = vor.u32 %v135, %v136
    %v138 = vsub.s32 4294967266, %v133
    %v139 = vadd.s32 %v138, 127
    %v140 = vshll.u32 %v139, 23
    %v141 = vor.u32 4788187, %v140
    %v142 = vand.u32 2147483647, %v141
    %v144 = vcvt.s32.f32 %v137
    %v145 = vmul.f32 %v144, %v142
    %v146 = vxor.u32 %v145, 2147483648
    %v147 = vsel %vm26, %v146, %v145
    %v148 = vsub.s32 4, %v124
    %v149 = vsel %vm26, %v148, %v124
    %v150 = vsel %vm25, %v23, %v147
    %v151 = vsel %vm25, 0, %v149
    %v152 = vmul.f32 %v150, %v150
    %v153 = vmul.f32 %v152, -0.001358992
    %v154 = vadd.f32 %v153, 0.041655596
    %v155 = vmul.f32 %v152, %v154
    %v156 = vadd.f32 %v155, -0.4999988
    %v157 = vmul.f32 %v152, %v156
    %v158 = vadd.f32 1.0, %v157
    %v159 = vmul.f32 %v150, %v150
    %v160 = vmul.f32 %v159, -0.00019511016
    %v161 = vadd.f32 %v160, 0.008332121
    %v162 = vmul.f32 %v159, %v161
    %v163 = vadd.f32 %v162, -0.16666654
    %v164 = vmul.f32 %v159, %v163
    %v165 = vadd.f32 %v164, 1.0
    %v166 = vmul.f32 %v165, %v150
    %vm167 = vweird.f32 %v23
    %v168 = vadd.s32 %v151, 3
    %v169 = vand.u32 %v168, 3
    %vm170 = vcmp.lt.s32.totalorder %v169, 2
    %vm171 = vcmp.eq.s32.totalorder %v169, 0
    %v172 = vxor.u32 %v166, 2147483648
    %v173 = vsel %vm171, %v158, %v172
    %vm174 = vcmp.eq.s32.totalorder %v169, 2
    %v175 = vxor.u32 %v158, 2147483648
    %v176 = vsel %vm174, %v175, %v166
    %v177 = vsel %vm170, %v173, %v176
    %v178 = vsel %vm167, nan, %v177
    %v179 = vand.u32 2147483647, %v23
    %vm180 = vcmp.le.f32.partialorder %v179, 0.7853982
    %vm181 = vcmp.lt.s32.totalorder %v23, 0
    %v182 = vand.u32 %v23, 2139095040
    %v183 = vshrl.u32 %v182, 23
    %v184 = vsub.s32 %v183, 127
    %v185 = vand.u32 2147483647, %v23
    %v186 = vand.u32 %v185, 8388607
    %v187 = vor.u32 %v186, 8388608
    %v188 = vsub.s32 0, %v187
    %v189 = vadd.s32 %v184, 1
    %vm190 = vcmp.gt.s32.totalorder %v189, 0
    %v191 = vsel %vm190, %v189, 0
    %v192 = vshrl.u32 %v191, 5
    %v193 = vand.u32 %v191, 31
    %v194 = vsub.s32 32, %v193
    %v195 = vshrl.u32 683565275, %v194
    %v196 = vshll.u32 683565275, %v193
    %v197 = vshrl.u32 2475754826, %v194
    %v198 = vor.u32 %v196, %v197
    %v199 = vshll.u32 2475754826, %v193
    %v200 = vshrl.u32 2131351028, %v194
    %v201 = vor.u32 %v199, %v200
    %v202 = vshll.u32 2131351028, %v193
    %v203 = vshrl.u32 2102212464, %v194
    %v204 = vor.u32 %v202, %v203
    %v205 = vshll.u32 2102212464, %v193
    %v206 = vshrl.u32 920167782, %v194
    %v207 = vor.u32 %v205, %v206
    %v208 = vshll.u32 920167782, %v193
    %v209 = vshrl.u32 1326507024, %v194
    %v210 = vor.u32 %v208, %v209
    %vm211 = vcmp.lt.s32.totalorder %v192, 1
    %vm212 = vcmp.lt.s32.totalorder %v192, 2
    %vm213 = vcmp.lt.s32.totalorder %v192, 3
    %vm214 = vcmp.lt.s32.totalorder %v192, 4
    %v215 = vsel %vm211, %v195, %v198
    %v216 = vsel %vm214, %v204, 2102212464
    %v217 = vsel %vm213, %v201, %v216
    %v218 = vsel %vm212, %v215, %v217
    %v219 = vsel %vm211, %v198, %v201
    %v220 = vsel %vm214, %v207, 920167782
    %v221 = vsel %vm213, %v204, %v220
    %v222 = vsel %vm212, %v219, %v221
    %v223 = vsel %vm211, %v201, %v204
    %v224 = vsel %vm214, %v210, 1326507024
    %v225 = vsel %vm213, %v207, %v224
    %v226 = vsel %vm212, %v223, %v225
    %v227 = vshll.u32 %v187, 8
    %v228 = vand.u32 %v227, 65535
    %v229 = vshrl.u32 %v227, 16
    %v230 = vand.u32 %v226, 65535
    %v231 = vshrl.u32 %v226, 16
    %v232 = vmul.u32 %v228, %v230
    %v233 = vmul.u32 %v228, %v231
    %v234 = vmul.u32 %v229, %v230
    %v235 = vmul.u32 %v229, %v231
    %v236 = vshll.u32 %v233, 16
    %v237 = vshrl.u32 %v233, 16
    %v238 = vshll.u32 %v234, 16
    %v239 = vshrl.u32 %v234, 16
    %vm240 = vc.u32 %v232, %v236
    %v241 = vsel %vm240, 1, 0
    %v242 = vadd.s32 %v232, %v236
    %v243 = vadd.s32 %v235, %v241
    %vm244 = vc.u32 %v242, %v238
    %v245 = vsel %vm244, 1, 0
    %v246 = vadd.s32 %v242, %v238
    %v247 = vadd.s32 %v243, %v245
    %v248 = vadd.s32 %v247, %v237
    %v249 = vadd.s32 %v248, %v239
    %v250 = vand.u32 %v227, 65535
    %v251 = vshrl.u32 %v227, 16
    %v252 = vand.u32 %v222, 65535
    %v253 = vshrl.u32 %v222, 16
    %v254 = vmul.u32 %v250, %v252
    %v255 = vmul.u32 %v250, %v253
    %v256 = vmul.u32 %v251, %v252
    %v257 = vmul.u32 %v251, %v253
    %v258 = vshll.u32 %v255, 16
    %v259 = vshrl.u32 %v255, 16
    %v260 = vshll.u32 %v256, 16
    %v261 = vshrl.u32 %v256, 16
    %vm262 = vc.u32 %v254, %v258
    %v263 = vsel %vm262, 1, 0
    %v264 = vadd.s32 %v254, %v258
    %v265 = vadd.s32 %v257, %v263
    %vm266 = vc.u32 %v264, %v260
    %v267 = vsel %vm266, 1, 0
    %v268 = vadd.s32 %v264, %v260
    %v269 = vadd.s32 %v265, %v267
    %v270 = vadd.s32 %v269, %v259
    %v271 = vadd.s32 %v270, %v261
    %v272 = vmul.u32 %v227, %v218
    %v273 = vadd.s32 %v249, %v268
    %vm274 = vc.u32 %v249, %v268
    %v275 = vadd.s32 %v271, 1
    %v276 = vsel %vm274, %v275, %v271
    %v277 = vadd.s32 %v272, %v276
    %v278 = vadd.s32 %v277, 536870912
    %v279 = vshrl.u32 %v278, 30
    %v280 = vshll.u32 %v279, 30
    %v281 = vsub.s32 %v277, %v280
    %vm282 = vcmp.lt.s32.totalorder %v281, 0
    %v283 = vsub.s32 0, %v281
    %v284 = vsel %vm282, %v283, %v281
    %v285 = vclz %v284
    %v286 = vsub.s32 %v285, 2
    %vm287 = vcmp.gt.s32.totalorder 0, %v286
    %v288 = vsel %vm287, 0, %v286
    %v289 = vsub.s32 32, %v288
    %v290 = vshll.u32 %v281, %v288
    %v291 = vshrl.u32 %v273, %v289
    %v292 = vor.u32 %v290, %v291
    %v293 = vsub.s32 4294967266, %v288
    %v294 = vadd.s32 %v293, 127
    %v295 = vshll.u32 %v294, 23
    %v296 = vor.u32 4788187, %v295
    %v297 = vand.u32 2147483647, %v296
    %v299 = vcvt.s32.f32 %v292
    %v300 = vmul.f32 %v299, %v297
    %v301 = vxor.u32 %v300, 2147483648
    %v302 = vsel %vm181, %v301, %v300
    %v303 = vsub.s32 4, %v279
    %v304 = vsel %vm181, %v303, %v279
    %v305 = vsel %vm180, %v23, %v302
    %v306 = vsel %vm180, 0, %v304
    %v307 = vmul.f32 %v305, %v305
    %v308 = vmul.f32 %v307, -0.001358992
    %v309 = vadd.f32 %v308, 0.041655596
    %v310 = vmul.f32 %v307, %v309
    %v311 = vadd.f32 %v310, -0.4999988
    %v312 = vmul.f32 %v307, %v311
    %v313 = vadd.f32 1.0, %v312
    %v314 = vmul.f32 %v305, %v305
    %v315 = vmul.f32 %v314, -0.00019511016
    %v316 = vadd.f32 %v315, 0.008332121
    %v317 = vmul.f32 %v314, %v316
    %v318 = vadd.f32 %v317, -0.16666654
    %v319 = vmul.f32 %v314, %v318
    %v320 = vadd.f32 %v319, 1.0
    %v321 = vmul.f32 %v320, %v305
    %vm322 = vweird.f32 %v23
    %v323 = vand.u32 %v306, 3
    %vm324 = vcmp.lt.s32.totalorder %v323, 2
    %vm325 = vcmp.eq.s32.totalorder %v323, 0
    %v326 = vxor.u32 %v321, 2147483648
    %v327 = vsel %vm325, %v313, %v326
    %vm328 = vcmp.eq.s32.totalorder %v323, 2
    %v329 = vxor.u32 %v313, 2147483648
    %v330 = vsel %vm328, %v329, %v321
    %v331 = vsel %vm324, %v327, %v330
    %v332 = vsel %vm322, nan, %v331
    %333 = vst [vmem:[#allocation2] sm:$0xff] %v178
    %334 = vst [vmem:[#allocation2 + $0x8] sm:$0xff] %v332
    // Predicated region
    $region10: #{gaussian_fourier_projection.1} parent=1 // pred_check
      _
    $region11: #{gaussian_fourier_projection.1} parent=1 // pred_check_branch
      %336 = sbr.rel (0) target = $region13
    $region12: #{gaussian_fourier_projection.1} parent=1 // pred_region
      %338 = vsyncadd [#allocation3], 0
      %s340 = sshll.u32 [#allocation2], 4
      %s341 = int_to_ptr.vmem [resolvable:$true] %s340
      %s342 = sshll.u32 %s2, 4
      %s343 = int_to_ptr.hbm [resolvable:$true] %s342
      %345 = dma.vmem_to_hbm [thread:$0]  %s341, 256, %s343, [#allocation3]
    $region13: #{gaussian_fourier_projection.1} parent=1 // pred_fallthru
      _
    // Predicated region
    $region14: #{gaussian_fourier_projection.1} parent=1 // pred_check
      _
    $region15: #{gaussian_fourier_projection.1} parent=1 // pred_check_branch
      %347 = sbr.rel (0) target = $region17
    $region16: #{gaussian_fourier_projection.1} parent=1 // pred_region
      %349 = dma.done [#allocation3], 256
    $region17: #{gaussian_fourier_projection.1} parent=1 // pred_fallthru
      _
    %350 = vsyncpa [#allocation3], 1

</llo_original>
